<compile_context>
chip_gen: v7x
topology: tpu7x:2x2x1
jax: 0.10.0
libtpu: 0.0.40
codegen_flags: <defaults>
</compile_context>

<pallas_src>
import functools

import jax
import jax.numpy as jnp
from jax.experimental import pallas as pl
from jax.experimental.pallas import tpu as pltpu


_LANE = 128          # TPU lane width: feature dims padded to this
_NEG_SLOPE = 0.2     # GATConv default negative_slope
_MASK = -1e30        # additive mask value for non-edges


def _round_up(x, m):
    return ((x + m - 1) // m) * m


def _vmem_limit_bytes():
    """~75% of physical VMEM (96 MiB on v5e/v6e, 48 MiB on v7x), capped at 100 MiB."""
    cap = 128 * 1024 * 1024
    try:
        cap = int(pltpu.get_tpu_info().vmem_capacity_bytes)
    except Exception:
        pass
    return min((cap * 3) // 4, 100 * 1024 * 1024)


def _pick_tiles(n_nodes):
    """Destination/source tile sizes.  256/512 fills the 2x256x256 MXUs of
    v6e/v7x; small graphs fall back to 128 (which also matches v5e's 4x128x128)."""
    n128 = _round_up(max(n_nodes, 1), _LANE)
    if n128 >= 512:
        tile_d, tile_s = 256, 512
    elif n128 >= 256:
        tile_d, tile_s = 256, 256
    else:
        tile_d, tile_s = 128, 128
    n_pad = _round_up(n_nodes, tile_s)           # tile_s = max(tile_d, tile_s)
    return n_pad, tile_d, tile_s


# --------------------------------------------------------------------------- #
# Kernel A: per-layer feature transform  H_aug = X @ W_aug                     #
# (W_aug carries a_src / a_dst in two spare padding columns, so two extra      #
#  columns of H_aug are the per-node attention scalars.)                       #
# --------------------------------------------------------------------------- #
def _linear_kernel(x_ref, w_ref, h_ref):
    h_ref[...] = jnp.dot(x_ref[...], w_ref[...],
                         preferred_element_type=jnp.float32).astype(h_ref.dtype)


def _linear(x, w, *, tile_rows, vmem_limit):
    n_pad, f_in = x.shape
    f_out = w.shape[1]
    return pl.pallas_call(
        _linear_kernel,
        out_shape=jax.ShapeDtypeStruct((n_pad, f_out), jnp.bfloat16),
        grid_spec=pltpu.PrefetchScalarGridSpec(
            num_scalar_prefetch=0,
            grid=(n_pad // tile_rows,),
            in_specs=[pl.BlockSpec((tile_rows, f_in), lambda i: (i, 0)),
                      # W is grid-invariant -> fetched once by the pipeline.
                      pl.BlockSpec((f_in, f_out), lambda i: (0, 0))],
            out_specs=pl.BlockSpec((tile_rows, f_out), lambda i: (i, 0))),
        compiler_params=pltpu.CompilerParams(
            dimension_semantics=("parallel",),
            vmem_limit_bytes=vmem_limit),
        cost_estimate=pl.CostEstimate(
            flops=2 * n_pad * f_in * f_out,
            transcendentals=0,
            bytes_accessed=2 * (n_pad * f_in + f_in * f_out + n_pad * f_out)),
    )(x, w)


# --------------------------------------------------------------------------- #
# Kernel B: masked GAT attention + aggregation, flash-style over source tiles. #
# Grid = (dst_tiles "parallel", src_tiles "arbitrary"); online softmax scratch #
# (running max, running sum, f32 accumulator) persists across the src axis.    #
# --------------------------------------------------------------------------- #
def _gat_attention_kernel(s_dst_ref, s_src_ref, adj_ref, h_src_ref, b_ref,
                          o_ref, m_sc, l_sc, acc_sc, *,
                          negative_slope, apply_relu):
    j = pl.program_id(1)

    @pl.when(j == 0)
    def _():
        m_sc[...] = jnp.full_like(m_sc, _MASK)
        l_sc[...] = jnp.zeros_like(l_sc)
        acc_sc[...] = jnp.zeros_like(acc_sc)

    # attention logits e[t, s] = LeakyReLU(a_dst.h_dst[t] + a_src.h_src[s]);
    # the scalars were produced for free by the two extra columns of W_aug.
    e = s_dst_ref[...] + s_src_ref[...]                        # [Td, Ts] f32
    e = jnp.where(e > 0, e, jnp.float32(negative_slope) * e)   # LeakyReLU
    adj_f = adj_ref[...].astype(jnp.float32)                   # 1.0 edge / 0.0 non-edge
    e = e + (adj_f - 1.0) * jnp.float32(-_MASK)                # additive mask (no select)

    # online (flash-style) softmax across source-node tiles
    m_prev = m_sc[...]
    m_new = jnp.maximum(m_prev, jnp.max(e, axis=-1, keepdims=True))
    scale = jnp.exp(m_prev - m_new)
    p = jnp.exp(e - m_new) * adj_f        # exact 0 off-graph (robust to all-masked tiles)
    l_sc[...] = scale * l_sc[...] + jnp.sum(p, axis=-1, keepdims=True)
    acc_sc[...] = scale * acc_sc[...] + jnp.dot(
        p.astype(h_src_ref.dtype), h_src_ref[...],
        preferred_element_type=jnp.float32)
    m_sc[...] = m_new

    @pl.when(j == pl.num_programs(1) - 1)
    def _():
        out = acc_sc[...] * pl.reciprocal(l_sc[...], approx=True) + b_ref[...]
        if apply_relu:
            out = jnp.maximum(out, 0.0)
        o_ref[...] = out.astype(o_ref.dtype)


def _gat_attention(h, adj, s_src_row, s_dst_col, bias, *, apply_relu, out_dtype,
                   tile_d, tile_s, vmem_limit):
    n_pad, f_pad = h.shape
    grid = (n_pad // tile_d, n_pad // tile_s)
    n_dst = grid[0]
    kernel = functools.partial(_gat_attention_kernel,
                               negative_slope=_NEG_SLOPE,
                               apply_relu=apply_relu)
    out_bytes = n_pad * f_pad * jnp.dtype(out_dtype).itemsize
    return pl.pallas_call(
        kernel,
        out_shape=jax.ShapeDtypeStruct((n_pad, f_pad), out_dtype),
        grid_spec=pltpu.PrefetchScalarGridSpec(
            num_scalar_prefetch=0,
            grid=grid,
            in_specs=[
                pl.BlockSpec((tile_d, 1), lambda i, j: (i, 0)),       # a_dst.h, dst tile
                pl.BlockSpec((1, tile_s), lambda i, j: (0, j)),       # a_src.h, src tile
                pl.BlockSpec((tile_d, tile_s), lambda i, j: (i, j)),  # int8 adjacency
                pl.BlockSpec((tile_s, f_pad), lambda i, j: (j, 0)),   # source features
                pl.BlockSpec((1, f_pad), lambda i, j: (0, 0)),        # bias (grid-invariant)
            ],
            out_specs=pl.BlockSpec((tile_d, f_pad), lambda i, j: (i, 0)),
            scratch_shapes=[pltpu.VMEM((tile_d, 1), jnp.float32),       # running max
                            pltpu.VMEM((tile_d, 1), jnp.float32),       # running sum
                            pltpu.VMEM((tile_d, f_pad), jnp.float32)]), # f32 accumulator
        compiler_params=pltpu.CompilerParams(
            dimension_semantics=("parallel", "arbitrary"),
            vmem_limit_bytes=vmem_limit),
        cost_estimate=pl.CostEstimate(
            flops=2 * n_pad * n_pad * f_pad + 8 * n_pad * n_pad,
            transcendentals=n_pad * n_pad + n_pad * grid[1],
            bytes_accessed=(n_pad * n_pad                   # int8 adjacency
                            + n_dst * n_pad * f_pad * 2     # h re-streamed per dst tile
                            + n_dst * n_pad * 4             # s_src re-streamed per dst tile
                            + n_pad * 4 + f_pad * 4 + out_bytes)),
    )(s_dst_col, s_src_row, adj, h, bias)


# --------------------------------------------------------------------------- #
# Parameters + full-graph forward (SAGE.full_forward semantics)               #
# --------------------------------------------------------------------------- #
def init_params(key, in_channels, hidden_channels, num_layers):
    """GATConv parameters with a_src / a_dst folded into two spare zero-padding
    output columns of W, so Kernel A produces the attention scalars for free."""
    params = []
    f_out_pad = _round_up(hidden_channels + 2, _LANE)   # +2 spare cols for a_src/a_dst
    f_in_pad = _round_up(in_channels, _LANE)
    f_in = in_channels
    for _ in range(num_layers):
        key, k_w, k_as, k_ad = jax.random.split(key, 4)
        lim_w = (6.0 / (f_in + hidden_channels)) ** 0.5
        w = jax.random.uniform(k_w, (f_in, hidden_channels), jnp.float32, -lim_w, lim_w)
        lim_a = (6.0 / (1 + hidden_channels)) ** 0.5
        a_src = jax.random.uniform(k_as, (hidden_channels,), jnp.float32, -lim_a, lim_a)
        a_dst = jax.random.uniform(k_ad, (hidden_channels,), jnp.float32, -lim_a, lim_a)
        bias = jnp.zeros((hidden_channels,), jnp.float32)      # GATConv bias init = 0

        w_aug = jnp.zeros((f_in_pad, f_out_pad), jnp.float32)
        w_aug = w_aug.at[:f_in, :hidden_channels].set(w)
        w_aug = w_aug.at[:f_in, hidden_channels].set(w @ a_src)      # col -> a_src . h
        w_aug = w_aug.at[:f_in, hidden_channels + 1].set(w @ a_dst)  # col -> a_dst . h
        bias_pad = (jnp.zeros((1, f_out_pad), jnp.float32)
                    .at[0, :hidden_channels].set(bias))

        params.append(dict(w_aug=w_aug.astype(jnp.bfloat16), bias=bias_pad))
        f_in = hidden_channels
        f_in_pad = f_out_pad
    return params


def sage_full_forward(x, edge_index, params, *, num_layers, hidden_channels):
    """x: [num_nodes, in_channels] f32; edge_index: [2, E] int32 (row0=src, row1=dst)."""
    n_nodes, in_channels = x.shape
    n_pad, tile_d, tile_s = _pick_tiles(n_nodes)
    vmem_limit = _vmem_limit_bytes()

    f_in_pad = params[0]["w_aug"].shape[0]
    h = (jnp.zeros((n_pad, f_in_pad), jnp.float32)
         .at[:n_nodes, :in_channels].set(x).astype(jnp.bfloat16))

    # int8 dense adjacency: adj[i, j] = 1 iff edge j -> i; diagonal = self loops
    # (GATConv add_self_loops=True; also keeps padded rows' softmax well-defined,
    #  and padded sources only connect to themselves so they never pollute real rows).
    src, dst = edge_index[0], edge_index[1]
    adj = jnp.zeros((n_pad, n_pad), jnp.int8)
    adj = adj.at[dst, src].set(1)
    diag = jnp.arange(n_pad)
    adj = adj.at[diag, diag].set(1)
    # TODO(synk): bit-pack adjacency (32 edges per int32 lane) for a further 8x
    # HBM-traffic cut, and a CSR + scalar-prefetch gather path for large sparse graphs.

    for layer in range(num_layers):
        p = params[layer]
        last = layer == num_layers - 1
        h_aug = _linear(h, p["w_aug"], tile_rows=tile_s, vmem_limit=vmem_limit)
        # Slice out the two folded attention-score columns (tiny XLA ops per layer).
        s_src_row = h_aug[:, hidden_channels].astype(jnp.float32)[None, :]      # [1, N]
        s_dst_col = h_aug[:, hidden_channels + 1].astype(jnp.float32)[:, None]  # [N, 1]
        h = _gat_attention(h_aug, adj, s_src_row, s_dst_col, p["bias"],
                           apply_relu=not last,
                           out_dtype=jnp.float32 if last else jnp.bfloat16,
                           tile_d=tile_d, tile_s=tile_s, vmem_limit=vmem_limit)
        # TODO(synk): F.dropout(p=0.5) between layers is the eval-mode identity here;
        # training-mode dropout would use pltpu.prng_seed / pltpu.prng_random_bits.
        # TODO(synk): the neighbour-sampled bipartite forward(x, adjs) variant would
        # restrict the destination grid to the first size[1] rows.

    return h[:n_nodes, :hidden_channels]


if __name__ == "__main__":
    key = jax.random.PRNGKey(0)
    k_param, k_x, k_e = jax.random.split(key, 3)

    num_nodes = 50
    in_channels = 16
    hidden_channels = 32
    num_layers = 2
    num_edges = 200

    params = init_params(k_param, in_channels, hidden_channels, num_layers)
    x = jax.random.normal(k_x, (num_nodes, in_channels), jnp.float32)
    edge_index = jax.random.randint(k_e, (2, num_edges), 0, num_nodes, jnp.int32)

    out = sage_full_forward(x, edge_index, params,
                            num_layers=num_layers,
                            hidden_channels=hidden_channels)
    out = jax.block_until_ready(out)

    assert out.shape == (num_nodes, hidden_channels)
    assert bool(jnp.all(jnp.isfinite(out)))
    print("KERNEL_OK")
</pallas_src>

<mosaic_0001>
module attributes {stable_mosaic.version = 11 : i64} {
  func.func @_linear_kernel(%arg0: i32, %arg1: memref<128x128xbf16, #tpu.memory_space<vmem>>, %arg2: memref<128x128xbf16, #tpu.memory_space<vmem>>, %arg3: memref<128x128xbf16, #tpu.memory_space<vmem>>) attributes {dimension_semantics = [#tpu.dimension_semantics<parallel>], iteration_bounds = array<i64: 1>, scalar_prefetch = 0 : i64, scratch_operands = 0 : i64, tpu.core_type = #tpu.core_type<tc>, window_params = [{transform_indices = @transform_0, window_bounds = array<i64: 128, 128>}, {pipeline_mode = #tpu.pipeline_mode<synchronous>, transform_indices = @transform_1, window_bounds = array<i64: 128, 128>}, {transform_indices = @transform_2, window_bounds = array<i64: 128, 128>}]} {
    %c0 = arith.constant 0 : index
    %c0_0 = arith.constant 0 : index
    %0 = vector.load %arg1[%c0, %c0_0] : memref<128x128xbf16, #tpu.memory_space<vmem>>, vector<128x128xbf16>
    %c0_1 = arith.constant 0 : index
    %c0_2 = arith.constant 0 : index
    %1 = vector.load %arg2[%c0_1, %c0_2] : memref<128x128xbf16, #tpu.memory_space<vmem>>, vector<128x128xbf16>
    %cst = arith.constant dense<0.000000e+00> : vector<128x128xf32>
    %2 = tpu.matmul %0, %1, %cst {dimension_numbers = #tpu.dot_dimension_numbers<[1], [0], [0], [1], [0, 0, 1, 1], [], []>} : vector<128x128xbf16>, vector<128x128xbf16>, vector<128x128xf32> -> vector<128x128xf32>
    %3 = arith.truncf %2 : vector<128x128xf32> to vector<128x128xbf16>
    %c0_3 = arith.constant 0 : index
    %c0_4 = arith.constant 0 : index
    %4 = vector.load %arg3[%c0_3, %c0_4] : memref<128x128xbf16, #tpu.memory_space<vmem>>, vector<128x128xbf16>
    tpu.vector_store %arg3[%c0_3, %c0_4], %3 {strides = array<i32>} : memref<128x128xbf16, #tpu.memory_space<vmem>>, vector<128x128xbf16>,
    return
  }
  func.func @transform_0(%arg0: i32) -> (i32, i32) {
    %c0_i32 = arith.constant 0 : i32
    %c0_i32_0 = arith.constant 0 : i32
    return %arg0, %c0_i32 : i32, i32
  }
  func.func @transform_1(%arg0: i32) -> (i32, i32) {
    %c0_i32 = arith.constant 0 : i32
    %c0_i32_0 = arith.constant 0 : i32
    %c0_i32_1 = arith.constant 0 : i32
    return %c0_i32, %c0_i32_0 : i32, i32
  }
  func.func @transform_2(%arg0: i32) -> (i32, i32) {
    %c0_i32 = arith.constant 0 : i32
    %c0_i32_0 = arith.constant 0 : i32
    return %arg0, %c0_i32 : i32, i32
  }
}

</mosaic_0001>

<llo_original>
// kernel: tpu_custom_call.1
$region0: #{tpu_custom_call.1}
  #allocation0 [shape = 'u32[]', space=smem, size = 0x4, offset = 0x4, fixed_abs, tag = 'smem constant byte address 0x4 - core index']
  #allocation1 [shape = 'u32[144,128]{1,0:T(1,128)}', space=vmem, size = 0x12000, scoped, tag = 'internal scratch']
  %s0 = inlined_call_operand.hbm [shape: bf16[128,128], index: 0, kind: input, shape index: {}]
  %s1 = inlined_call_operand.hbm [shape: bf16[128,128], index: 1, kind: input, shape index: {}]
  %s2 = inlined_call_operand.hbm [shape: bf16[128,128], index: 2, kind: output, shape index: {}]
  %s3 = sld [smem:[#allocation0]]
  $region26: #{tpu_custom_call.1} parent=0
    _
  %s5 = ssub.s32 1, %s3
  %s6 = scalar_select 0, %s5, %s3
  $region1: #{tpu_custom_call.1} parent=0
    #allocation2 [shape = 'u8[32768]{0}', space=vmem, size = 0x8000, scoped, tag = 'input window, operand 0, single buffered']
    #allocation3 [shape = 's32[1]{0}', space=sflag, size = 0x4, scoped, tag = 'scoped memory for tpu_custom_call.1']
    #allocation4 [shape = 's32[1]{0}', space=sflag, size = 0x4, scoped, tag = 'scoped memory for tpu_custom_call.1']
    #allocation5 [shape = 'u8[32768]{0}', space=vmem, size = 0x8000, scoped, tag = 'input window, operand 1, single buffered']
    #allocation6 [shape = 's32[1]{0}', space=sflag, size = 0x4, scoped, tag = 'scoped memory for tpu_custom_call.1']
    #allocation7 [shape = 'u8[32768]{0}', space=vmem, size = 0x8000, scoped, tag = 'output window, operand 0, single buffered']
    %7 = vsyncpa [#allocation3], 0
    %8 = vsyncpa [#allocation6], 0
    %9 = vsyncpa [#allocation4], 0
    // Predicated region
    $region2: #{tpu_custom_call.1} parent=1 // pred_check
      _
    $region3: #{tpu_custom_call.1} parent=1 // pred_check_branch
      %11 = sbr.rel (0) target = $region5
    $region4: #{tpu_custom_call.1} parent=1 // pred_region
      %s13 = ssub.s32 1024, 1024
      %14 = vsyncadd [#allocation3], %s13
      %s15 = sshll.u32 [#allocation2], 4
      %s16 = int_to_ptr.vmem [resolvable:$true] %s15
      %21 = dma.hbm_to_vmem [thread:$0]  %s0, 1024, %s16, [#allocation3], 64, 64, 4
    $region5: #{tpu_custom_call.1} parent=1 // pred_fallthru
      _
    // Predicated region
    $region6: #{tpu_custom_call.1} parent=1 // pred_check
      _
    $region7: #{tpu_custom_call.1} parent=1 // pred_check_branch
      %23 = sbr.rel (0) target = $region9
    $region8: #{tpu_custom_call.1} parent=1 // pred_region
      %s25 = ssub.s32 1024, 1024
      %26 = vsyncadd [#allocation6], %s25
      %s27 = sshll.u32 [#allocation5], 4
      %s28 = int_to_ptr.vmem [resolvable:$true] %s27
      %33 = dma.hbm_to_vmem [thread:$0]  %s1, 1024, %s28, [#allocation6], 64, 64, 4
    $region9: #{tpu_custom_call.1} parent=1 // pred_fallthru
      _
    // Predicated region
    $region10: #{tpu_custom_call.1} parent=1 // pred_check
      _
    $region11: #{tpu_custom_call.1} parent=1 // pred_check_branch
      %35 = sbr.rel (0) target = $region13
    $region12: #{tpu_custom_call.1} parent=1 // pred_region
      %36 = dma.done [#allocation3], 1024
    $region13: #{tpu_custom_call.1} parent=1 // pred_fallthru
      _
    // Predicated region
    $region14: #{tpu_custom_call.1} parent=1 // pred_check
      _
    $region15: #{tpu_custom_call.1} parent=1 // pred_check_branch
      %38 = sbr.rel (0) target = $region17
    $region16: #{tpu_custom_call.1} parent=1 // pred_region
      %39 = dma.done [#allocation6], 1024
    $region17: #{tpu_custom_call.1} parent=1 // pred_fallthru
      _
    %v41 = vld [vmem:[#allocation2] sm:$0xf]
    %v42 = vld [vmem:[#allocation2 + $0x4] sm:$0xf]
    %v43 = vld [vmem:[#allocation2 + $0x8] sm:$0xf]
    %v44 = vld [vmem:[#allocation2 + $0xc] sm:$0xf]
    %v45 = vld [vmem:[#allocation2 + $0x10] sm:$0xf]
    %v46 = vld [vmem:[#allocation2 + $0x14] sm:$0xf]
    %v47 = vld [vmem:[#allocation2 + $0x18] sm:$0xf]
    %v48 = vld [vmem:[#allocation2 + $0x1c] sm:$0xf]
    %v49 = vld [vmem:[#allocation2 + $0x20] sm:$0xf]
    %v50 = vld [vmem:[#allocation2 + $0x24] sm:$0xf]
    %v51 = vld [vmem:[#allocation2 + $0x28] sm:$0xf]
    %v52 = vld [vmem:[#allocation2 + $0x2c] sm:$0xf]
    %v53 = vld [vmem:[#allocation2 + $0x30] sm:$0xf]
    %v54 = vld [vmem:[#allocation2 + $0x34] sm:$0xf]
    %v55 = vld [vmem:[#allocation2 + $0x38] sm:$0xf]
    %v56 = vld [vmem:[#allocation2 + $0x3c] sm:$0xf]
    %v57 = vld [vmem:[#allocation5] sm:$0xf]
    %v58 = vld [vmem:[#allocation5 + $0x4] sm:$0xf]
    %v59 = vld [vmem:[#allocation5 + $0x8] sm:$0xf]
    %v60 = vld [vmem:[#allocation5 + $0xc] sm:$0xf]
    %v61 = vld [vmem:[#allocation5 + $0x10] sm:$0xf]
    %v62 = vld [vmem:[#allocation5 + $0x14] sm:$0xf]
    %v63 = vld [vmem:[#allocation5 + $0x18] sm:$0xf]
    %v64 = vld [vmem:[#allocation5 + $0x1c] sm:$0xf]
    %v65 = vld [vmem:[#allocation5 + $0x20] sm:$0xf]
    %v66 = vld [vmem:[#allocation5 + $0x24] sm:$0xf]
    %v67 = vld [vmem:[#allocation5 + $0x28] sm:$0xf]
    %v68 = vld [vmem:[#allocation5 + $0x2c] sm:$0xf]
    %v69 = vld [vmem:[#allocation5 + $0x30] sm:$0xf]
    %v70 = vld [vmem:[#allocation5 + $0x34] sm:$0xf]
    %v71 = vld [vmem:[#allocation5 + $0x38] sm:$0xf]
    %v72 = vld [vmem:[#allocation5 + $0x3c] sm:$0xf]
    %v89 = vunpack.c.l.b16 %v41
    %v90 = vunpack.c.l.b16 %v42
    %v91 = vunpack.c.l.b16 %v43
    %v92 = vunpack.c.l.b16 %v44
    %v93 = vunpack.c.l.b16 %v45
    %v94 = vunpack.c.l.b16 %v46
    %v95 = vunpack.c.l.b16 %v47
    %v96 = vunpack.c.l.b16 %v48
    %v97 = vunpack.c.l.b16 %v49
    %v98 = vunpack.c.l.b16 %v50
    %v99 = vunpack.c.l.b16 %v51
    %v100 = vunpack.c.l.b16 %v52
    %v101 = vunpack.c.l.b16 %v53
    %v102 = vunpack.c.l.b16 %v54
    %v103 = vunpack.c.l.b16 %v55
    %v104 = vunpack.c.l.b16 %v56
    %v105 = vpack.c.b16 %v90, %v89
    %v106 = vpack.c.b16 %v92, %v91
    %v107 = vpack.c.b16 %v94, %v93
    %v108 = vpack.c.b16 %v96, %v95
    %v109 = vpack.c.b16 %v98, %v97
    %v110 = vpack.c.b16 %v100, %v99
    %v111 = vpack.c.b16 %v102, %v101
    %v112 = vpack.c.b16 %v104, %v103
    %v137 = vunpack.c.l.b16 %v57
    %v138 = vunpack.c.l.b16 %v58
    %v139 = vunpack.c.l.b16 %v59
    %v140 = vunpack.c.l.b16 %v60
    %v141 = vunpack.c.l.b16 %v61
    %v142 = vunpack.c.l.b16 %v62
    %v143 = vunpack.c.l.b16 %v63
    %v144 = vunpack.c.l.b16 %v64
    %v145 = vunpack.c.l.b16 %v65
    %v146 = vunpack.c.l.b16 %v66
    %v147 = vunpack.c.l.b16 %v67
    %v148 = vunpack.c.l.b16 %v68
    %v149 = vunpack.c.l.b16 %v69
    %v150 = vunpack.c.l.b16 %v70
    %v151 = vunpack.c.l.b16 %v71
    %v152 = vunpack.c.l.b16 %v72
    %v153 = vpack.c.b16 %v138, %v137
    %v154 = vpack.c.b16 %v140, %v139
    %v155 = vpack.c.b16 %v142, %v141
    %v156 = vpack.c.b16 %v144, %v143
    %v157 = vpack.c.b16 %v146, %v145
    %v158 = vpack.c.b16 %v148, %v147
    %v159 = vpack.c.b16 %v150, %v149
    %v160 = vpack.c.b16 %v152, %v151
    %169 = vmatprep.subr.bf16.mxu0 0
    %170 = vmatpush1.bf16.msra.mxu0 %v153
    %171 = vmatprep.subr.bf16.mxu0 0
    %172 = vmatpush1.bf16.msra.mxu0 %v154
    %173 = vmatprep.subr.bf16.mxu0 0
    %174 = vmatpush1.bf16.msra.mxu0 %v155
    %175 = vmatprep.subr.bf16.mxu0 0
    %176 = vmatpush1.bf16.msra.mxu0 %v156
    %177 = vmatprep.subr.bf16.mxu0 0
    %178 = vmatpush1.bf16.msra.mxu0 %v157
    %179 = vmatprep.subr.bf16.mxu0 0
    %180 = vmatpush1.bf16.msra.mxu0 %v158
    %181 = vmatprep.subr.bf16.mxu0 0
    %182 = vmatpush1.bf16.msra.mxu0 %v159
    %183 = vmatprep.subr.bf16.mxu0 0
    %184 = vmatpush1.bf16.msra.mxu0 %v160
    %185 = vmatprep.subr.bf16.mxu0 0
    %186 = vmatpush1.bf16.msra.mxu0 0
    %187 = vmatprep.subr.bf16.mxu0 0
    %188 = vmatpush1.bf16.msra.mxu0 0
    %189 = vmatprep.subr.bf16.mxu0 0
    %190 = vmatpush1.bf16.msra.mxu0 0
    %191 = vmatprep.subr.bf16.mxu0 0
    %192 = vmatpush1.bf16.msra.mxu0 0
    %193 = vmatprep.subr.bf16.mxu0 0
    %194 = vmatpush1.bf16.msra.mxu0 0
    %195 = vmatprep.subr.bf16.mxu0 0
    %196 = vmatpush1.bf16.msra.mxu0 0
    %197 = vmatprep.subr.bf16.mxu0 0
    %198 = vmatpush1.bf16.msra.mxu0 0
    %199 = vmatprep.subr.bf16.mxu0 0
    %200 = vmatpush1.bf16.msra.mxu0 0
    %201 = vmatprep.mubr.bf16.mxu0 0
    %202 = vmatmul.mubr.bf16.gmra.mrb[0].mxu0 %v105
    %v203 = vpop.f32.mrb[0].mxu0
    %v204 = vadd.f32 0.0, %v203
    %v205 = vpop.f32.mrb[0].mxu0
    %v206 = vpop.f32.mrb[0].mxu0
    %v207 = vadd.f32 0.0, %v206
    %v208 = vpop.f32.mrb[0].mxu0
    %209 = vmatprep.mubr.bf16.mxu0 0
    %210 = vmatmul.mubr.bf16.gmra.mrb[0].mxu0 %v106
    %v211 = vpop.f32.mrb[0].mxu0
    %v212 = vadd.f32 0.0, %v211
    %v213 = vpop.f32.mrb[0].mxu0
    %v214 = vpop.f32.mrb[0].mxu0
    %v215 = vadd.f32 0.0, %v214
    %v216 = vpop.f32.mrb[0].mxu0
    %217 = vmatprep.mubr.bf16.mxu0 0
    %218 = vmatmul.mubr.bf16.gmra.mrb[0].mxu0 %v107
    %v219 = vpop.f32.mrb[0].mxu0
    %v220 = vadd.f32 0.0, %v219
    %v221 = vpop.f32.mrb[0].mxu0
    %v222 = vpop.f32.mrb[0].mxu0
    %v223 = vadd.f32 0.0, %v222
    %v224 = vpop.f32.mrb[0].mxu0
    %225 = vmatprep.mubr.bf16.mxu0 0
    %226 = vmatmul.mubr.bf16.gmra.mrb[0].mxu0 %v108
    %v227 = vpop.f32.mrb[0].mxu0
    %v228 = vadd.f32 0.0, %v227
    %v229 = vpop.f32.mrb[0].mxu0
    %v230 = vpop.f32.mrb[0].mxu0
    %v231 = vadd.f32 0.0, %v230
    %v232 = vpop.f32.mrb[0].mxu0
    %233 = vmatprep.mubr.bf16.mxu0 0
    %234 = vmatmul.mubr.bf16.gmra.mrb[0].mxu0 %v109
    %v235 = vpop.f32.mrb[0].mxu0
    %v236 = vadd.f32 0.0, %v235
    %v237 = vpop.f32.mrb[0].mxu0
    %v238 = vpop.f32.mrb[0].mxu0
    %v239 = vadd.f32 0.0, %v238
    %v240 = vpop.f32.mrb[0].mxu0
    %241 = vmatprep.mubr.bf16.mxu0 0
    %242 = vmatmul.mubr.bf16.gmra.mrb[0].mxu0 %v110
    %v243 = vpop.f32.mrb[0].mxu0
    %v244 = vadd.f32 0.0, %v243
    %v245 = vpop.f32.mrb[0].mxu0
    %v246 = vpop.f32.mrb[0].mxu0
    %v247 = vadd.f32 0.0, %v246
    %v248 = vpop.f32.mrb[0].mxu0
    %249 = vmatprep.mubr.bf16.mxu0 0
    %250 = vmatmul.mubr.bf16.gmra.mrb[0].mxu0 %v111
    %v251 = vpop.f32.mrb[0].mxu0
    %v252 = vadd.f32 0.0, %v251
    %v253 = vpop.f32.mrb[0].mxu0
    %v254 = vpop.f32.mrb[0].mxu0
    %v255 = vadd.f32 0.0, %v254
    %v256 = vpop.f32.mrb[0].mxu0
    %257 = vmatprep.mubr.bf16.mxu0 0
    %258 = vmatmul.mubr.bf16.gmra.mrb[0].mxu0 %v112
    %v259 = vpop.f32.mrb[0].mxu0
    %v260 = vadd.f32 0.0, %v259
    %v261 = vpop.f32.mrb[0].mxu0
    %v262 = vpop.f32.mrb[0].mxu0
    %v263 = vadd.f32 0.0, %v262
    %v264 = vpop.f32.mrb[0].mxu0
    %265 = vdwg.mxu0
    %v266 = vpack.c.bf16 %v207, %v204
    %v267 = vpack.c.bf16 %v215, %v212
    %v268 = vpack.c.bf16 %v223, %v220
    %v269 = vpack.c.bf16 %v231, %v228
    %v270 = vpack.c.bf16 %v239, %v236
    %v271 = vpack.c.bf16 %v247, %v244
    %v272 = vpack.c.bf16 %v255, %v252
    %v273 = vpack.c.bf16 %v263, %v260
    %v282 = vunpack.c.l.b16 %v266
    %v283 = vunpack.c.h.b16 %v266
    %v284 = vunpack.c.l.b16 %v267
    %v285 = vunpack.c.h.b16 %v267
    %v286 = vunpack.c.l.b16 %v268
    %v287 = vunpack.c.h.b16 %v268
    %v288 = vunpack.c.l.b16 %v269
    %v289 = vunpack.c.h.b16 %v269
    %v290 = vunpack.c.l.b16 %v270
    %v291 = vunpack.c.h.b16 %v270
    %v292 = vunpack.c.l.b16 %v271
    %v293 = vunpack.c.h.b16 %v271
    %v294 = vunpack.c.l.b16 %v272
    %v295 = vunpack.c.h.b16 %v272
    %v296 = vunpack.c.l.b16 %v273
    %v297 = vunpack.c.h.b16 %v273
    %v298 = vpack.c.b16 %v282, %v282
    %v299 = vpack.c.b16 %v283, %v283
    %v300 = vpack.c.b16 %v284, %v284
    %v301 = vpack.c.b16 %v285, %v285
    %v302 = vpack.c.b16 %v286, %v286
    %v303 = vpack.c.b16 %v287, %v287
    %v304 = vpack.c.b16 %v288, %v288
    %v305 = vpack.c.b16 %v289, %v289
    %v306 = vpack.c.b16 %v290, %v290
    %v307 = vpack.c.b16 %v291, %v291
    %v308 = vpack.c.b16 %v292, %v292
    %v309 = vpack.c.b16 %v293, %v293
    %v310 = vpack.c.b16 %v294, %v294
    %v311 = vpack.c.b16 %v295, %v295
    %v312 = vpack.c.b16 %v296, %v296
    %v313 = vpack.c.b16 %v297, %v297
    %330 = vst [vmem:[#allocation7] sm:$0xf] %v298
    %331 = vst [vmem:[#allocation7 + $0x4] sm:$0xf] %v299
    %332 = vst [vmem:[#allocation7 + $0x8] sm:$0xf] %v300
    %333 = vst [vmem:[#allocation7 + $0xc] sm:$0xf] %v301
    %334 = vst [vmem:[#allocation7 + $0x10] sm:$0xf] %v302
    %335 = vst [vmem:[#allocation7 + $0x14] sm:$0xf] %v303
    %336 = vst [vmem:[#allocation7 + $0x18] sm:$0xf] %v304
    %337 = vst [vmem:[#allocation7 + $0x1c] sm:$0xf] %v305
    %338 = vst [vmem:[#allocation7 + $0x20] sm:$0xf] %v306
    %339 = vst [vmem:[#allocation7 + $0x24] sm:$0xf] %v307
    %340 = vst [vmem:[#allocation7 + $0x28] sm:$0xf] %v308
    %341 = vst [vmem:[#allocation7 + $0x2c] sm:$0xf] %v309
    %342 = vst [vmem:[#allocation7 + $0x30] sm:$0xf] %v310
    %343 = vst [vmem:[#allocation7 + $0x34] sm:$0xf] %v311
    %344 = vst [vmem:[#allocation7 + $0x38] sm:$0xf] %v312
    %345 = vst [vmem:[#allocation7 + $0x3c] sm:$0xf] %v313
    // Predicated region
    $region18: #{tpu_custom_call.1} parent=1 // pred_check
      _
    $region19: #{tpu_custom_call.1} parent=1 // pred_check_branch
      %347 = sbr.rel (0) target = $region21
    $region20: #{tpu_custom_call.1} parent=1 // pred_region
      %s349 = ssub.s32 1024, 1024
      %350 = vsyncadd [#allocation4], %s349
      %s351 = sshll.u32 [#allocation7], 4
      %s352 = int_to_ptr.vmem [resolvable:$true] %s351
      %357 = dma.vmem_to_hbm [thread:$0]  %s352, 1024, %s2, [#allocation4], 64, 64, 4
    $region21: #{tpu_custom_call.1} parent=1 // pred_fallthru
      _
    // Predicated region
    $region22: #{tpu_custom_call.1} parent=1 // pred_check
      _
    $region23: #{tpu_custom_call.1} parent=1 // pred_check_branch
      %359 = sbr.rel (0) target = $region25
    $region24: #{tpu_custom_call.1} parent=1 // pred_region
      %360 = dma.done [#allocation4], 1024
    $region25: #{tpu_custom_call.1} parent=1 // pred_fallthru
      _
    %361 = vsyncpa [#allocation3], 1
    %362 = vsyncpa [#allocation6], 1
    %363 = vsyncpa [#allocation4], 1

</llo_original>
